<compile_context>
chip_gen: v7x
topology: tpu7x:2x2x1
jax: 0.10.0
libtpu: 0.0.40
codegen_flags: <defaults>
</compile_context>

<pallas_src>
import jax
import jax.numpy as jnp
from jax.experimental import pallas as pl
from jax.experimental.pallas import tpu as pltpu


def phi3_mlp_kernel(x_ref, wg_ref, wu_ref, wd_ref, o_ref, acc_ref):
    """Grid point (i, k): rows tile i, intermediate tile k (reduction axis)."""
    k = pl.program_id(1)

    @pl.when(k == 0)
    def _():
        acc_ref[...] = jnp.zeros_like(acc_ref)

    x = x_ref[...]                                                     # (tm, H)

    # gate / up projections for this intermediate tile; f32 accumulation on MXU.
    gate = jnp.dot(x, wg_ref[...], preferred_element_type=jnp.float32)  # (tm, ti)
    up = jnp.dot(x, wu_ref[...], preferred_element_type=jnp.float32)    # (tm, ti)

    # SiLU(gate) * up  (sigmoid -> EUP slot, muls -> VALU; hidden under MXU work)
    h = up * (gate * jax.nn.sigmoid(gate))                             # (tm, ti) f32

    # Partial down_proj, accumulated in f32 across the intermediate tiles.
    acc_ref[...] += jnp.dot(h.astype(wd_ref.dtype), wd_ref[...],
                            preferred_element_type=jnp.float32)

    @pl.when(k == pl.num_programs(1) - 1)
    def _():
        o_ref[...] = acc_ref[...].astype(o_ref.dtype)


def _device_defaults():
    """Per-generation (tm_cap, ti_cap, vmem_limit_bytes)."""
    try:
        kind = jax.devices()[0].device_kind.lower()
    except Exception:  # pragma: no cover
        kind = ""
    if "v2" in kind or "v3" in kind:
        # Old chips: tiny VMEM; leave the compiler's default scoped limit.
        return 256, 512, None
    if "v6" in kind:
        # v6e: 128 MiB physical VMEM; tm=1024 makes the kernel MXU-bound.
        return 1024, 512, 96 * 1024 * 1024
    if "v5" in kind:
        # v5e: default scoped limit is 16 MiB -> must raise it explicitly.
        return 512, 512, 64 * 1024 * 1024
    # v7x (64 MiB physical VMEM) and unknown: conservative but compute-bound.
    return 512, 512, 48 * 1024 * 1024


def _pick_ti(inter, preferred):
    """Largest multiple of 128 <= preferred that divides inter."""
    assert inter % 128 == 0, "intermediate size must be a multiple of 128"
    if inter <= preferred:
        return inter
    t = (preferred // 128) * 128
    while t > 128 and inter % t != 0:
        t -= 128
    return t


def _round_up(x, m):
    return ((x + m - 1) // m) * m


def phi3_mlp(hidden_states, w_gate_up, w_down, *, tm=None, ti=None,
             vmem_limit_bytes=None, compute_dtype=jnp.bfloat16):
    """hidden_states: [B, S, H]; w_gate_up: [H, 2*I]; w_down: [I, H].

    Weights are stored right-multiplied (transpose of torch Linear.weight),
    so y = x @ W matches the torch semantics.
    """
    B, S, H = hidden_states.shape
    two_i = w_gate_up.shape[1]
    inter = two_i // 2
    assert w_down.shape == (inter, H)

    tm_def, ti_def, vmem_def = _device_defaults()
    tm = tm_def if tm is None else tm
    ti = ti_def if ti is None else ti
    if vmem_limit_bytes is None:
        vmem_limit_bytes = vmem_def

    out_dtype = hidden_states.dtype

    # Cast to the compute dtype (bf16 by default) in the wrapper; accumulation
    # inside the kernel stays f32.
    M = B * S
    x2d = hidden_states.reshape(M, H).astype(compute_dtype)
    w_fused = w_gate_up.astype(compute_dtype)       # no slicing -> no HBM copy
    w_down_c = w_down.astype(compute_dtype)

    # Tile selection: tm is 16-aligned (bf16 sublane packing); M is padded to a
    # multiple of tm (zero rows are independent -> harmless).
    # TODO(synk): on v7x with decode-sized M (M <= tm) the second TensorCore
    # idles; a core-split of the intermediate axis would recover up to 2x.
    tm = max(16, (min(tm, _round_up(M, 16)) // 16) * 16)
    m_pad = _round_up(M, tm)
    if m_pad != M:
        x2d = jnp.pad(x2d, ((0, m_pad - M), (0, 0)))

    ti = _pick_ti(inter, ti)
    n_ti = inter // ti
    grid = (m_pad // tm, n_ti)

    # Advisory cost estimate for the XLA scheduler (weights are re-streamed
    # once per row tile).
    itemsize = jnp.dtype(compute_dtype).itemsize
    flops = 6 * M * H * inter                  # gate + up + down matmuls
    transcendentals = M * inter                # sigmoid
    bytes_accessed = (
        m_pad * H * itemsize                                   # x
        + m_pad * H * jnp.dtype(out_dtype).itemsize            # out
        + grid[0] * 3 * H * inter * itemsize                   # streamed weights
    )

    out2d = pl.pallas_call(
        phi3_mlp_kernel,
        out_shape=jax.ShapeDtypeStruct((m_pad, H), out_dtype),
        grid_spec=pltpu.PrefetchScalarGridSpec(
            num_scalar_prefetch=0,
            grid=grid,
            in_specs=[
                pl.BlockSpec((tm, H), lambda i, k: (i, 0)),           # x row tile
                pl.BlockSpec((H, ti), lambda i, k: (0, k)),           # gate half
                pl.BlockSpec((H, ti), lambda i, k: (0, k + n_ti)),    # up half
                pl.BlockSpec((ti, H), lambda i, k: (k, 0)),           # w_down tile
            ],
            out_specs=pl.BlockSpec((tm, H), lambda i, k: (i, 0)),
            scratch_shapes=[pltpu.VMEM((tm, H), jnp.float32)],        # f32 accumulator
        ),
        compiler_params=pltpu.CompilerParams(
            dimension_semantics=("parallel", "arbitrary"),
            vmem_limit_bytes=vmem_limit_bytes,
        ),
        cost_estimate=pl.CostEstimate(
            flops=flops,
            transcendentals=transcendentals,
            bytes_accessed=bytes_accessed,
        ),
    )(x2d, w_fused, w_fused, w_down_c)

    out2d = out2d[:M] if m_pad != M else out2d
    return (out2d.reshape(B, S, H),)


def phi3_mlp_ref(hidden_states, w_gate_up, w_down):
    """Pure-JAX f32 reference matching the PyTorch Phi3MLP forward."""
    gu = jnp.einsum("bsh,hd->bsd", hidden_states, w_gate_up)
    inter = w_down.shape[0]
    gate, up = gu[..., :inter], gu[..., inter:]
    h = up * (gate * jax.nn.sigmoid(gate))
    return (jnp.einsum("bsi,ih->bsh", h, w_down),)


if __name__ == "__main__":
    # Small, module-consistent shapes: batch=2, seq=8, hidden=32, intermediate=128
    B, S, H, I = 2, 8, 32, 128

    key = jax.random.PRNGKey(0)
    kx, kgu, kd = jax.random.split(key, 3)

    hidden_states = jax.random.normal(kx, (B, S, H), dtype=jnp.float32)
    # torch Linear stores [out, in]; we store the transposed right-multiplied form.
    w_gate_up = jax.random.normal(kgu, (H, 2 * I), dtype=jnp.float32) * 0.05
    w_down = jax.random.normal(kd, (I, H), dtype=jnp.float32) * 0.05

    (out,) = phi3_mlp(hidden_states, w_gate_up, w_down)
    out = jax.block_until_ready(out)

    (ref,) = phi3_mlp_ref(hidden_states, w_gate_up, w_down)
    assert out.shape == (B, S, H)
    # Kernel computes in bf16 (f32 accumulation); compare against f32 reference
    # with bf16-appropriate tolerances.
    assert jnp.allclose(out, ref, atol=1e-2, rtol=5e-2), (
        float(jnp.max(jnp.abs(out - ref))))

    print("KERNEL_OK")
</pallas_src>

<mosaic_0001>
module attributes {stable_mosaic.version = 11 : i64} {
  func.func @phi3_mlp_kernel(%arg0: i32, %arg1: i32, %arg2: memref<16x32xbf16, #tpu.memory_space<vmem>>, %arg3: memref<32x128xbf16, #tpu.memory_space<vmem>>, %arg4: memref<32x128xbf16, #tpu.memory_space<vmem>>, %arg5: memref<128x32xbf16, #tpu.memory_space<vmem>>, %arg6: memref<16x32xf32, #tpu.memory_space<vmem>>, %arg7: memref<16x32xf32, #tpu.memory_space<vmem>>) attributes {dimension_semantics = [#tpu.dimension_semantics<parallel>, #tpu.dimension_semantics<arbitrary>], iteration_bounds = array<i64: 1, 1>, scalar_prefetch = 0 : i64, scratch_operands = 1 : i64, tpu.core_type = #tpu.core_type<tc>, window_params = [{transform_indices = @transform_0, window_bounds = array<i64: 16, 32>}, {transform_indices = @transform_1, window_bounds = array<i64: 32, 128>}, {transform_indices = @transform_2, window_bounds = array<i64: 32, 128>}, {transform_indices = @transform_3, window_bounds = array<i64: 128, 32>}, {transform_indices = @transform_4, window_bounds = array<i64: 16, 32>}]} {
    %c0_i32 = arith.constant 0 : i32
    %0 = arith.cmpi eq, %arg1, %c0_i32 : i32
    %1 = arith.extui %0 : i1 to i32
    %c0_i32_0 = arith.constant 0 : i32
    %2 = arith.cmpi ne, %1, %c0_i32_0 : i32
    scf.if %2 {
      %cst_17 = arith.constant 0.000000e+00 : f32
      %24 = vector.broadcast %cst_17 : f32 to vector<16x32xf32>
      %c0_18 = arith.constant 0 : index
      %c0_19 = arith.constant 0 : index
      %25 = vector.load %arg7[%c0_18, %c0_19] : memref<16x32xf32, #tpu.memory_space<vmem>>, vector<16x32xf32>
      tpu.vector_store %arg7[%c0_18, %c0_19], %24 {strides = array<i32>} : memref<16x32xf32, #tpu.memory_space<vmem>>, vector<16x32xf32>,
    } else {
    }
    %c0 = arith.constant 0 : index
    %c0_1 = arith.constant 0 : index
    %3 = vector.load %arg2[%c0, %c0_1] : memref<16x32xbf16, #tpu.memory_space<vmem>>, vector<16x32xbf16>
    %c0_2 = arith.constant 0 : index
    %c0_3 = arith.constant 0 : index
    %4 = vector.load %arg3[%c0_2, %c0_3] : memref<32x128xbf16, #tpu.memory_space<vmem>>, vector<32x128xbf16>
    %cst = arith.constant dense<0.000000e+00> : vector<16x128xf32>
    %5 = tpu.matmul %3, %4, %cst {dimension_numbers = #tpu.dot_dimension_numbers<[1], [0], [0], [1], [0, 0, 1, 1], [], []>} : vector<16x32xbf16>, vector<32x128xbf16>, vector<16x128xf32> -> vector<16x128xf32>
    %c0_4 = arith.constant 0 : index
    %c0_5 = arith.constant 0 : index
    %6 = vector.load %arg4[%c0_4, %c0_5] : memref<32x128xbf16, #tpu.memory_space<vmem>>, vector<32x128xbf16>
    %cst_6 = arith.constant dense<0.000000e+00> : vector<16x128xf32>
    %7 = tpu.matmul %3, %6, %cst_6 {dimension_numbers = #tpu.dot_dimension_numbers<[1], [0], [0], [1], [0, 0, 1, 1], [], []>} : vector<16x32xbf16>, vector<32x128xbf16>, vector<16x128xf32> -> vector<16x128xf32>
    %8 = arith.negf %5 : vector<16x128xf32>
    %9 = math.exp %8 : vector<16x128xf32>
    %cst_7 = arith.constant 1.000000e+00 : f32
    %10 = vector.broadcast %cst_7 : f32 to vector<16x128xf32>
    %11 = arith.addf %10, %9 : vector<16x128xf32>
    %12 = arith.divf %10, %11 : vector<16x128xf32>
    %13 = arith.mulf %5, %12 : vector<16x128xf32>
    %14 = arith.mulf %7, %13 : vector<16x128xf32>
    %c0_8 = arith.constant 0 : index
    %c0_9 = arith.constant 0 : index
    %15 = vector.load %arg7[%c0_8, %c0_9] : memref<16x32xf32, #tpu.memory_space<vmem>>, vector<16x32xf32>
    %16 = arith.truncf %14 : vector<16x128xf32> to vector<16x128xbf16>
    %c0_10 = arith.constant 0 : index
    %c0_11 = arith.constant 0 : index
    %17 = vector.load %arg5[%c0_10, %c0_11] : memref<128x32xbf16, #tpu.memory_space<vmem>>, vector<128x32xbf16>
    %cst_12 = arith.constant dense<0.000000e+00> : vector<16x32xf32>
    %18 = tpu.matmul %16, %17, %cst_12 {dimension_numbers = #tpu.dot_dimension_numbers<[1], [0], [0], [1], [0, 0, 1, 1], [], []>} : vector<16x128xbf16>, vector<128x32xbf16>, vector<16x32xf32> -> vector<16x32xf32>
    %19 = arith.addf %15, %18 : vector<16x32xf32>
    %c0_13 = arith.constant 0 : index
    %c0_14 = arith.constant 0 : index
    %20 = vector.load %arg7[%c0_13, %c0_14] : memref<16x32xf32, #tpu.memory_space<vmem>>, vector<16x32xf32>
    tpu.vector_store %arg7[%c0_13, %c0_14], %19 {strides = array<i32>} : memref<16x32xf32, #tpu.memory_space<vmem>>, vector<16x32xf32>,
    %c0_i32_15 = arith.constant 0 : i32
    %21 = arith.cmpi eq, %arg1, %c0_i32_15 : i32
    %22 = arith.extui %21 : i1 to i32
    %c0_i32_16 = arith.constant 0 : i32
    %23 = arith.cmpi ne, %22, %c0_i32_16 : i32
    scf.if %23 {
      %c0_17 = arith.constant 0 : index
      %c0_18 = arith.constant 0 : index
      %24 = vector.load %arg7[%c0_17, %c0_18] : memref<16x32xf32, #tpu.memory_space<vmem>>, vector<16x32xf32>
      %c0_19 = arith.constant 0 : index
      %c0_20 = arith.constant 0 : index
      %25 = vector.load %arg6[%c0_19, %c0_20] : memref<16x32xf32, #tpu.memory_space<vmem>>, vector<16x32xf32>
      tpu.vector_store %arg6[%c0_19, %c0_20], %24 {strides = array<i32>} : memref<16x32xf32, #tpu.memory_space<vmem>>, vector<16x32xf32>,
    } else {
    }
    return
  }
  func.func @transform_0(%arg0: i32, %arg1: i32) -> (i32, i32) {
    %c0_i32 = arith.constant 0 : i32
    %c0_i32_0 = arith.constant 0 : i32
    return %arg0, %c0_i32 : i32, i32
  }
  func.func @transform_1(%arg0: i32, %arg1: i32) -> (i32, i32) {
    %c0_i32 = arith.constant 0 : i32
    %c0_i32_0 = arith.constant 0 : i32
    return %c0_i32, %arg1 : i32, i32
  }
  func.func @transform_2(%arg0: i32, %arg1: i32) -> (i32, i32) {
    %c1_i32 = arith.constant 1 : i32
    %0 = arith.addi %arg1, %c1_i32 : i32
    %c0_i32 = arith.constant 0 : i32
    %c0_i32_0 = arith.constant 0 : i32
    return %c0_i32, %0 : i32, i32
  }
  func.func @transform_3(%arg0: i32, %arg1: i32) -> (i32, i32) {
    %c0_i32 = arith.constant 0 : i32
    %c0_i32_0 = arith.constant 0 : i32
    return %arg1, %c0_i32 : i32, i32
  }
  func.func @transform_4(%arg0: i32, %arg1: i32) -> (i32, i32) {
    %c0_i32 = arith.constant 0 : i32
    %c0_i32_0 = arith.constant 0 : i32
    return %arg0, %c0_i32 : i32, i32
  }
}

</mosaic_0001>

<llo_original>
// kernel: tpu_custom_call.1
$region0: #{tpu_custom_call.1}
  #allocation0 [shape = 'u32[]', space=smem, size = 0x4, offset = 0x4, fixed_abs, tag = 'smem constant byte address 0x4 - core index']
  #allocation1 [shape = 'u32[144,128]{1,0:T(1,128)}', space=vmem, size = 0x12000, scoped, tag = 'internal scratch']
  #allocation2 [shape = 'f32[16,32]{1,0:T(8,128)}', space=vmem, size = 0x2000, scoped, tag = 'scratch operand']
  %s0 = inlined_call_operand.vmem [shape: bf16[16,32], index: 0, kind: input, shape index: {}]
  %s1 = inlined_call_operand.vmem [shape: bf16[32,256], index: 1, kind: input, shape index: {}]
  %s2 = inlined_call_operand.vmem [shape: bf16[32,256], index: 2, kind: input, shape index: {}]
  %s3 = inlined_call_operand.vmem [shape: bf16[128,32], index: 3, kind: input, shape index: {}]
  %s4 = inlined_call_operand.hbm [shape: f32[16,32], index: 4, kind: output, shape index: {}]
  %s5 = sld [smem:[#allocation0]]
  $region116: #{tpu_custom_call.1} parent=0
    _
  %s7 = ssub.s32 1, %s5
  %s8 = scalar_select 0, %s7, %s5
  $region1: #{tpu_custom_call.1} parent=0
    #allocation3 [shape = 'u8[8192]{0}', space=vmem, size = 0x2000, scoped, tag = 'input window, operand 1, single buffered']
    #allocation4 [shape = 'u8[8192]{0}', space=vmem, size = 0x2000, scoped, tag = 'input window, operand 2, single buffered']
    #allocation5 [shape = 'u8[8192]{0}', space=vmem, size = 0x2000, scoped, tag = 'output window, operand 0, single buffered']
    #allocation6 [shape = 's32[1]{0}', space=sflag, size = 0x4, scoped, tag = 'scoped memory for tpu_custom_call.1']
    %9 = vsyncpa [#allocation6], 0
    // Predicated region
    $region2: #{tpu_custom_call.1} parent=1 // pred_check
      _
    $region3: #{tpu_custom_call.1} parent=1 // pred_check_branch
      %11 = sbr.rel (0) target = $region5
    $region4: #{tpu_custom_call.1} parent=1 // pred_region
      _
    $region5: #{tpu_custom_call.1} parent=1 // pred_fallthru
      _
    // Predicated region
    $region6: #{tpu_custom_call.1} parent=1 // pred_check
      _
    $region7: #{tpu_custom_call.1} parent=1 // pred_check_branch
      %13 = sbr.rel (0) target = $region9
    $region8: #{tpu_custom_call.1} parent=1 // pred_region
      // Predicated region
      $region10: #{tpu_custom_call.1} parent=8 // pred_check
        _
      $region11: #{tpu_custom_call.1} parent=8 // pred_check_branch
        %15 = sbr.rel (0) target = $region13
      $region12: #{tpu_custom_call.1} parent=8 // pred_region
        // Predicated region
        $region14: #{tpu_custom_call.1} parent=12 // pred_check
          _
        $region15: #{tpu_custom_call.1} parent=12 // pred_check_branch
          %17 = sbr.rel target = $region17
        $region16: #{tpu_custom_call.1} parent=12 // pred_region
          // Predicated region
          $region29: #{tpu_custom_call.1} parent=16 // pred_check
            _
          $region30: #{tpu_custom_call.1} parent=16 // pred_check_branch
            %38 = sbr.rel (0) target = $region32
          $region31: #{tpu_custom_call.1} parent=16 // pred_region
            loop: start=0, step=1, limit=1
            $region33: #{tpu_custom_call.1} parent=31 // loop_pre_header
              _
            $region34: #{tpu_custom_call.1} parent=31 // loop_header
              %s40 = sphi 0, %s44
              %p41 = scmp.ge.s32.totalorder %s40, 1
              %s45 = sphi %s1, %s1
              %s46 = sphi [#allocation3], [#allocation3]
            $region35: #{tpu_custom_call.1} parent=31 // loop_header_branch
              %43 = sbr.rel (%p41) target = $region39
            $region36: #{tpu_custom_call.1} parent=31 // loop_body
              _
            $region37: #{tpu_custom_call.1} parent=31 // loop_footer
              %s44 = sadd.s32 1, %s40
            $region38: #{tpu_custom_call.1} parent=31 // loop_footer_branch
              %39 = sbr.rel target = $region34
            $region39: #{tpu_custom_call.1} parent=31 // loop_exit
              _
            loop: start=0, step=1, limit=1
            $region40: #{tpu_custom_call.1} parent=31 // loop_pre_header
              _
            $region41: #{tpu_custom_call.1} parent=31 // loop_header
              %s49 = sphi 0, %s53
              %p50 = scmp.ge.s32.totalorder %s49, 1
              %s54 = sphi %s1, %s1
              %s55 = sphi [#allocation3], [#allocation3]
            $region42: #{tpu_custom_call.1} parent=31 // loop_header_branch
              %52 = sbr.rel (%p50) target = $region46
            $region43: #{tpu_custom_call.1} parent=31 // loop_body
              %v56 = vld [vmem:[%s54] sm:$0xf]
              %57 = vst [vmem:[%s55] sm:$0xf] %v56
              %v58 = vld [vmem:[%s54 + $0x8] sm:$0xf]
              %59 = vst [vmem:[%s55 + $0x4] sm:$0xf] %v58
              %v60 = vld [vmem:[%s54 + $0x10] sm:$0xf]
              %61 = vst [vmem:[%s55 + $0x8] sm:$0xf] %v60
              %v62 = vld [vmem:[%s54 + $0x18] sm:$0xf]
              %63 = vst [vmem:[%s55 + $0xc] sm:$0xf] %v62
            $region44: #{tpu_custom_call.1} parent=31 // loop_footer
              %s53 = sadd.s32 1, %s49
            $region45: #{tpu_custom_call.1} parent=31 // loop_footer_branch
              %48 = sbr.rel target = $region41
            $region46: #{tpu_custom_call.1} parent=31 // loop_exit
              _
          $region32: #{tpu_custom_call.1} parent=16 // pred_fallthru
            _
        $region17: #{tpu_custom_call.1} parent=12 // pred_fallthru
          _
        // Predicated region
        $region18: #{tpu_custom_call.1} parent=12 // pred_check
          _
        $region19: #{tpu_custom_call.1} parent=12 // pred_check_branch
          %19 = sbr.rel (0) target = $region21
        $region20: #{tpu_custom_call.1} parent=12 // pred_region
          loop: start=0, step=1, limit=1
          $region22: #{tpu_custom_call.1} parent=20 // loop_pre_header
            _
          $region23: #{tpu_custom_call.1} parent=20 // loop_header
            %s22 = sphi 0, %s26
            %p23 = scmp.ge.s32.totalorder %s22, 1
            %s27 = sphi %s1, %s1
            %s28 = sphi [#allocation3], [#allocation3]
          $region24: #{tpu_custom_call.1} parent=20 // loop_header_branch
            %25 = sbr.rel (%p23) target = $region28
          $region25: #{tpu_custom_call.1} parent=20 // loop_body
            %v29 = vld [vmem:[%s27] sm:$0xf]
            %30 = vst [vmem:[%s28] sm:$0xf] %v29
            %v31 = vld [vmem:[%s27 + $0x8] sm:$0xf]
            %32 = vst [vmem:[%s28 + $0x4] sm:$0xf] %v31
            %v33 = vld [vmem:[%s27 + $0x10] sm:$0xf]
            %34 = vst [vmem:[%s28 + $0x8] sm:$0xf] %v33
            %v35 = vld [vmem:[%s27 + $0x18] sm:$0xf]
            %36 = vst [vmem:[%s28 + $0xc] sm:$0xf] %v35
          $region26: #{tpu_custom_call.1} parent=20 // loop_footer
            %s26 = sadd.s32 1, %s22
          $region27: #{tpu_custom_call.1} parent=20 // loop_footer_branch
            %21 = sbr.rel target = $region23
          $region28: #{tpu_custom_call.1} parent=20 // loop_exit
            _
        $region21: #{tpu_custom_call.1} parent=12 // pred_fallthru
          _
      $region13: #{tpu_custom_call.1} parent=8 // pred_fallthru
        _
      %64 = vnop
    $region9: #{tpu_custom_call.1} parent=1 // pred_fallthru
      _
    // Predicated region
    $region47: #{tpu_custom_call.1} parent=1 // pred_check
      _
    $region48: #{tpu_custom_call.1} parent=1 // pred_check_branch
      %66 = sbr.rel (0) target = $region50
    $region49: #{tpu_custom_call.1} parent=1 // pred_region
      %s67 = sadd.s32 0, 1
      %s68 = smul.addr %s67, 4
      %s69 = scalar_lea.vmem %s2, %s68
      // Predicated region
      $region51: #{tpu_custom_call.1} parent=49 // pred_check
        _
      $region52: #{tpu_custom_call.1} parent=49 // pred_check_branch
        %71 = sbr.rel (0) target = $region54
      $region53: #{tpu_custom_call.1} parent=49 // pred_region
        // Predicated region
        $region55: #{tpu_custom_call.1} parent=53 // pred_check
          _
        $region56: #{tpu_custom_call.1} parent=53 // pred_check_branch
          %73 = sbr.rel target = $region58
        $region57: #{tpu_custom_call.1} parent=53 // pred_region
          // Predicated region
          $region70: #{tpu_custom_call.1} parent=57 // pred_check
            _
          $region71: #{tpu_custom_call.1} parent=57 // pred_check_branch
            %94 = sbr.rel (0) target = $region73
          $region72: #{tpu_custom_call.1} parent=57 // pred_region
            loop: start=0, step=1, limit=1
            $region74: #{tpu_custom_call.1} parent=72 // loop_pre_header
              _
            $region75: #{tpu_custom_call.1} parent=72 // loop_header
              %s96 = sphi 0, %s100
              %p97 = scmp.ge.s32.totalorder %s96, 1
              %s101 = sphi %s69, %s69
              %s102 = sphi [#allocation4], [#allocation4]
            $region76: #{tpu_custom_call.1} parent=72 // loop_header_branch
              %99 = sbr.rel (%p97) target = $region80
            $region77: #{tpu_custom_call.1} parent=72 // loop_body
              _
            $region78: #{tpu_custom_call.1} parent=72 // loop_footer
              %s100 = sadd.s32 1, %s96
            $region79: #{tpu_custom_call.1} parent=72 // loop_footer_branch
              %95 = sbr.rel target = $region75
            $region80: #{tpu_custom_call.1} parent=72 // loop_exit
              _
            loop: start=0, step=1, limit=1
            $region81: #{tpu_custom_call.1} parent=72 // loop_pre_header
              _
            $region82: #{tpu_custom_call.1} parent=72 // loop_header
              %s105 = sphi 0, %s109
              %p106 = scmp.ge.s32.totalorder %s105, 1
              %s110 = sphi %s69, %s69
              %s111 = sphi [#allocation4], [#allocation4]
            $region83: #{tpu_custom_call.1} parent=72 // loop_header_branch
              %108 = sbr.rel (%p106) target = $region87
            $region84: #{tpu_custom_call.1} parent=72 // loop_body
              %v112 = vld [vmem:[%s110] sm:$0xf]
              %113 = vst [vmem:[%s111] sm:$0xf] %v112
              %v114 = vld [vmem:[%s110 + $0x8] sm:$0xf]
              %115 = vst [vmem:[%s111 + $0x4] sm:$0xf] %v114
              %v116 = vld [vmem:[%s110 + $0x10] sm:$0xf]
              %117 = vst [vmem:[%s111 + $0x8] sm:$0xf] %v116
              %v118 = vld [vmem:[%s110 + $0x18] sm:$0xf]
              %119 = vst [vmem:[%s111 + $0xc] sm:$0xf] %v118
            $region85: #{tpu_custom_call.1} parent=72 // loop_footer
              %s109 = sadd.s32 1, %s105
            $region86: #{tpu_custom_call.1} parent=72 // loop_footer_branch
              %104 = sbr.rel target = $region82
            $region87: #{tpu_custom_call.1} parent=72 // loop_exit
              _
          $region73: #{tpu_custom_call.1} parent=57 // pred_fallthru
            _
        $region58: #{tpu_custom_call.1} parent=53 // pred_fallthru
          _
        // Predicated region
        $region59: #{tpu_custom_call.1} parent=53 // pred_check
          _
        $region60: #{tpu_custom_call.1} parent=53 // pred_check_branch
          %75 = sbr.rel (0) target = $region62
        $region61: #{tpu_custom_call.1} parent=53 // pred_region
          loop: start=0, step=1, limit=1
          $region63: #{tpu_custom_call.1} parent=61 // loop_pre_header
            _
          $region64: #{tpu_custom_call.1} parent=61 // loop_header
            %s78 = sphi 0, %s82
            %p79 = scmp.ge.s32.totalorder %s78, 1
            %s83 = sphi %s69, %s69
            %s84 = sphi [#allocation4], [#allocation4]
          $region65: #{tpu_custom_call.1} parent=61 // loop_header_branch
            %81 = sbr.rel (%p79) target = $region69
          $region66: #{tpu_custom_call.1} parent=61 // loop_body
            %v85 = vld [vmem:[%s83] sm:$0xf]
            %86 = vst [vmem:[%s84] sm:$0xf] %v85
            %v87 = vld [vmem:[%s83 + $0x8] sm:$0xf]
            %88 = vst [vmem:[%s84 + $0x4] sm:$0xf] %v87
            %v89 = vld [vmem:[%s83 + $0x10] sm:$0xf]
            %90 = vst [vmem:[%s84 + $0x8] sm:$0xf] %v89
            %v91 = vld [vmem:[%s83 + $0x18] sm:$0xf]
            %92 = vst [vmem:[%s84 + $0xc] sm:$0xf] %v91
          $region67: #{tpu_custom_call.1} parent=61 // loop_footer
            %s82 = sadd.s32 1, %s78
          $region68: #{tpu_custom_call.1} parent=61 // loop_footer_branch
            %77 = sbr.rel target = $region64
          $region69: #{tpu_custom_call.1} parent=61 // loop_exit
            _
        $region62: #{tpu_custom_call.1} parent=53 // pred_fallthru
          _
      $region54: #{tpu_custom_call.1} parent=49 // pred_fallthru
        _
      %120 = vnop
    $region50: #{tpu_custom_call.1} parent=1 // pred_fallthru
      _
    // Predicated region
    $region88: #{tpu_custom_call.1} parent=1 // pred_check
      _
    $region89: #{tpu_custom_call.1} parent=1 // pred_check_branch
      %122 = sbr.rel (0) target = $region91
    $region90: #{tpu_custom_call.1} parent=1 // pred_region
      _
    $region91: #{tpu_custom_call.1} parent=1 // pred_fallthru
      _
    // Predicated region
    $region92: #{tpu_custom_call.1} parent=1 // pred_check
      _
    $region93: #{tpu_custom_call.1} parent=1 // pred_check_branch
      %124 = sbr.rel (0) target = $region95
    $region94: #{tpu_custom_call.1} parent=1 // pred_region
      _
    $region95: #{tpu_custom_call.1} parent=1 // pred_fallthru
      _
    // Predicated region
    $region96: #{tpu_custom_call.1} parent=1 // pred_check
      _
    $region97: #{tpu_custom_call.1} parent=1 // pred_check_branch
      %126 = sbr.rel (0) target = $region99
    $region98: #{tpu_custom_call.1} parent=1 // pred_region
      _
    $region99: #{tpu_custom_call.1} parent=1 // pred_fallthru
      _
    %s127 = sadd.s32 0, 1
    %p129 = scmp.eq.s32.totalorder 0, 0
    // Predicated region
    $region100: #{tpu_custom_call.1} parent=1 // pred_check
      %p130 = pneg %p129
    $region101: #{tpu_custom_call.1} parent=1 // pred_check_branch
      %132 = sbr.rel (%p130) target = $region103
    $region102: #{tpu_custom_call.1} parent=1 // pred_region
      %vm133 = vcmask 261120
      %134 = vst.msk [vmem:[#allocation2] sm:$0xff] %vm133, 0.0
      %135 = vst.msk [vmem:[#allocation2 + $0x8] sm:$0xff] %vm133, 0.0
    $region103: #{tpu_custom_call.1} parent=1 // pred_fallthru
      _
    %v136 = vld [vmem:[%s0] sm:$0xf]
    %v137 = vld [vmem:[%s0 + $0x4] sm:$0xf]
    %v138 = vld [vmem:[#allocation3] sm:$0xf]
    %v139 = vld [vmem:[#allocation3 + $0x4] sm:$0xf]
    %v140 = vld [vmem:[#allocation3 + $0x8] sm:$0xf]
    %v141 = vld [vmem:[#allocation3 + $0xc] sm:$0xf]
    %v144 = vunpack.c.l.b16 %v136
    %v145 = vunpack.c.l.b16 %v137
    %v146 = vpack.c.b16 %v145, %v144
    %v151 = vunpack.c.l.b16 %v138
    %v152 = vunpack.c.l.b16 %v139
    %v153 = vunpack.c.l.b16 %v140
    %v154 = vunpack.c.l.b16 %v141
    %v155 = vpack.c.b16 %v152, %v151
    %v156 = vpack.c.b16 %v154, %v153
    %vm159 = vcmask 261120
    %v161 = vsel %vm159, %v146, 0
    %163 = vmatprep.subr.bf16.mxu0 0
    %164 = vmatpush1.bf16.msra.mxu0 %v155
    %165 = vmatprep.subr.bf16.mxu0 0
    %166 = vmatpush1.bf16.msra.mxu0 %v156
    %167 = vmatprep.subr.bf16.mxu0 0
    %168 = vmatpush1.bf16.msra.mxu0 0
    %169 = vmatprep.subr.bf16.mxu0 0
    %170 = vmatpush1.bf16.msra.mxu0 0
    %171 = vmatprep.subr.bf16.mxu0 0
    %172 = vmatpush1.bf16.msra.mxu0 0
    %173 = vmatprep.subr.bf16.mxu0 0
    %174 = vmatpush1.bf16.msra.mxu0 0
    %175 = vmatprep.subr.bf16.mxu0 0
    %176 = vmatpush1.bf16.msra.mxu0 0
    %177 = vmatprep.subr.bf16.mxu0 0
    %178 = vmatpush1.bf16.msra.mxu0 0
    %179 = vmatprep.subr.bf16.mxu0 0
    %180 = vmatpush1.bf16.msra.mxu0 0
    %181 = vmatprep.subr.bf16.mxu0 0
    %182 = vmatpush1.bf16.msra.mxu0 0
    %183 = vmatprep.subr.bf16.mxu0 0
    %184 = vmatpush1.bf16.msra.mxu0 0
    %185 = vmatprep.subr.bf16.mxu0 0
    %186 = vmatpush1.bf16.msra.mxu0 0
    %187 = vmatprep.subr.bf16.mxu0 0
    %188 = vmatpush1.bf16.msra.mxu0 0
    %189 = vmatprep.subr.bf16.mxu0 0
    %190 = vmatpush1.bf16.msra.mxu0 0
    %191 = vmatprep.subr.bf16.mxu0 0
    %192 = vmatpush1.bf16.msra.mxu0 0
    %193 = vmatprep.subr.bf16.mxu0 0
    %194 = vmatpush1.bf16.msra.mxu0 0
    %195 = vmatprep.mubr.bf16.mxu0 0
    %196 = vmatmul.mubr.bf16.gmra.mrb[0].mxu0 %v161
    %v197 = vpop.f32.mrb[0].mxu0
    %v198 = vadd.f32 0.0, %v197
    %v199 = vpop.f32.mrb[0].mxu0
    %v200 = vpop.f32.mrb[0].mxu0
    %v201 = vadd.f32 0.0, %v200
    %v202 = vpop.f32.mrb[0].mxu0
    %203 = vdwg.mxu0
    %v204 = vld [vmem:[#allocation4] sm:$0xf]
    %v205 = vld [vmem:[#allocation4 + $0x4] sm:$0xf]
    %v206 = vld [vmem:[#allocation4 + $0x8] sm:$0xf]
    %v207 = vld [vmem:[#allocation4 + $0xc] sm:$0xf]
    %v212 = vunpack.c.l.b16 %v204
    %v213 = vunpack.c.l.b16 %v205
    %v214 = vunpack.c.l.b16 %v206
    %v215 = vunpack.c.l.b16 %v207
    %v216 = vpack.c.b16 %v213, %v212
    %v217 = vpack.c.b16 %v215, %v214
    %220 = vmatprep.subr.bf16.mxu0 0
    %221 = vmatpush1.bf16.msra.mxu0 %v216
    %222 = vmatprep.subr.bf16.mxu0 0
    %223 = vmatpush1.bf16.msra.mxu0 %v217
    %224 = vmatprep.subr.bf16.mxu0 0
    %225 = vmatpush1.bf16.msra.mxu0 0
    %226 = vmatprep.subr.bf16.mxu0 0
    %227 = vmatpush1.bf16.msra.mxu0 0
    %228 = vmatprep.subr.bf16.mxu0 0
    %229 = vmatpush1.bf16.msra.mxu0 0
    %230 = vmatprep.subr.bf16.mxu0 0
    %231 = vmatpush1.bf16.msra.mxu0 0
    %232 = vmatprep.subr.bf16.mxu0 0
    %233 = vmatpush1.bf16.msra.mxu0 0
    %234 = vmatprep.subr.bf16.mxu0 0
    %235 = vmatpush1.bf16.msra.mxu0 0
    %236 = vmatprep.subr.bf16.mxu0 0
    %237 = vmatpush1.bf16.msra.mxu0 0
    %238 = vmatprep.subr.bf16.mxu0 0
    %239 = vmatpush1.bf16.msra.mxu0 0
    %240 = vmatprep.subr.bf16.mxu0 0
    %241 = vmatpush1.bf16.msra.mxu0 0
    %242 = vmatprep.subr.bf16.mxu0 0
    %243 = vmatpush1.bf16.msra.mxu0 0
    %244 = vmatprep.subr.bf16.mxu0 0
    %245 = vmatpush1.bf16.msra.mxu0 0
    %246 = vmatprep.subr.bf16.mxu0 0
    %247 = vmatpush1.bf16.msra.mxu0 0
    %248 = vmatprep.subr.bf16.mxu0 0
    %249 = vmatpush1.bf16.msra.mxu0 0
    %250 = vmatprep.subr.bf16.mxu0 0
    %251 = vmatpush1.bf16.msra.mxu0 0
    %252 = vmatprep.mubr.bf16.mxu0 0
    %253 = vmatmul.mubr.bf16.gmra.mrb[0].mxu0 %v161
    %v254 = vpop.f32.mrb[0].mxu0
    %v255 = vadd.f32 0.0, %v254
    %v256 = vpop.f32.mrb[0].mxu0
    %v257 = vpop.f32.mrb[0].mxu0
    %v258 = vadd.f32 0.0, %v257
    %v259 = vpop.f32.mrb[0].mxu0
    %260 = vdwg.mxu0
    %v261 = vxor.u32 %v198, 2147483648
    %v262 = vxor.u32 %v201, 2147483648
    %v263 = vmul.f32 %v261, 1.442695
    %v264 = vpow.pop %v263
    %v265 = vmul.f32 %v262, 1.442695
    %v266 = vpow.pop %v265
    %v267 = vadd.f32 %v264, 1.0
    %v268 = vadd.f32 %v266, 1.0
    %v269 = vrcp.pop %v267
    %v270 = vmul.f32 1.0, %v269
    %v271 = vrcp.pop %v268
    %v272 = vmul.f32 1.0, %v271
    %v273 = vmul.f32 %v198, %v270
    %v274 = vmul.f32 %v201, %v272
    %v275 = vmul.f32 %v255, %v273
    %v276 = vmul.f32 %v258, %v274
    %v277 = vld [vmem:[#allocation2] sm:$0xff]
    %v278 = vld [vmem:[#allocation2 + $0x8] sm:$0xff]
    %v279 = vpack.c.bf16 %v276, %v275
    %v280 = vld [vmem:[%s3] sm:$0xf]
    %v281 = vld [vmem:[%s3 + $0x4] sm:$0xf]
    %v282 = vld [vmem:[%s3 + $0x8] sm:$0xf]
    %v283 = vld [vmem:[%s3 + $0xc] sm:$0xf]
    %v284 = vld [vmem:[%s3 + $0x10] sm:$0xf]
    %v285 = vld [vmem:[%s3 + $0x14] sm:$0xf]
    %v286 = vld [vmem:[%s3 + $0x18] sm:$0xf]
    %v287 = vld [vmem:[%s3 + $0x1c] sm:$0xf]
    %v288 = vld [vmem:[%s3 + $0x20] sm:$0xf]
    %v289 = vld [vmem:[%s3 + $0x24] sm:$0xf]
    %v290 = vld [vmem:[%s3 + $0x28] sm:$0xf]
    %v291 = vld [vmem:[%s3 + $0x2c] sm:$0xf]
    %v292 = vld [vmem:[%s3 + $0x30] sm:$0xf]
    %v293 = vld [vmem:[%s3 + $0x34] sm:$0xf]
    %v294 = vld [vmem:[%s3 + $0x38] sm:$0xf]
    %v295 = vld [vmem:[%s3 + $0x3c] sm:$0xf]
    %v312 = vunpack.c.l.b16 %v280
    %v313 = vunpack.c.l.b16 %v281
    %v314 = vunpack.c.l.b16 %v282
    %v315 = vunpack.c.l.b16 %v283
    %v316 = vunpack.c.l.b16 %v284
    %v317 = vunpack.c.l.b16 %v285
    %v318 = vunpack.c.l.b16 %v286
    %v319 = vunpack.c.l.b16 %v287
    %v320 = vunpack.c.l.b16 %v288
    %v321 = vunpack.c.l.b16 %v289
    %v322 = vunpack.c.l.b16 %v290
    %v323 = vunpack.c.l.b16 %v291
    %v324 = vunpack.c.l.b16 %v292
    %v325 = vunpack.c.l.b16 %v293
    %v326 = vunpack.c.l.b16 %v294
    %v327 = vunpack.c.l.b16 %v295
    %v328 = vpack.c.b16 %v313, %v312
    %v329 = vpack.c.b16 %v315, %v314
    %v330 = vpack.c.b16 %v317, %v316
    %v331 = vpack.c.b16 %v319, %v318
    %v332 = vpack.c.b16 %v321, %v320
    %v333 = vpack.c.b16 %v323, %v322
    %v334 = vpack.c.b16 %v325, %v324
    %v335 = vpack.c.b16 %v327, %v326
    %344 = vmatprep.subr.bf16.mxu0 0
    %345 = vmatpush1.bf16.msra.mxu0 %v328
    %346 = vmatprep.subr.bf16.mxu0 0
    %347 = vmatpush1.bf16.msra.mxu0 %v329
    %348 = vmatprep.subr.bf16.mxu0 0
    %349 = vmatpush1.bf16.msra.mxu0 %v330
    %350 = vmatprep.subr.bf16.mxu0 0
    %351 = vmatpush1.bf16.msra.mxu0 %v331
    %352 = vmatprep.subr.bf16.mxu0 0
    %353 = vmatpush1.bf16.msra.mxu0 %v332
    %354 = vmatprep.subr.bf16.mxu0 0
    %355 = vmatpush1.bf16.msra.mxu0 %v333
    %356 = vmatprep.subr.bf16.mxu0 0
    %357 = vmatpush1.bf16.msra.mxu0 %v334
    %358 = vmatprep.subr.bf16.mxu0 0
    %359 = vmatpush1.bf16.msra.mxu0 %v335
    %360 = vmatprep.subr.bf16.mxu0 0
    %361 = vmatpush1.bf16.msra.mxu0 0
    %362 = vmatprep.subr.bf16.mxu0 0
    %363 = vmatpush1.bf16.msra.mxu0 0
    %364 = vmatprep.subr.bf16.mxu0 0
    %365 = vmatpush1.bf16.msra.mxu0 0
    %366 = vmatprep.subr.bf16.mxu0 0
    %367 = vmatpush1.bf16.msra.mxu0 0
    %368 = vmatprep.subr.bf16.mxu0 0
    %369 = vmatpush1.bf16.msra.mxu0 0
    %370 = vmatprep.subr.bf16.mxu0 0
    %371 = vmatpush1.bf16.msra.mxu0 0
    %372 = vmatprep.subr.bf16.mxu0 0
    %373 = vmatpush1.bf16.msra.mxu0 0
    %374 = vmatprep.subr.bf16.mxu0 0
    %375 = vmatpush1.bf16.msra.mxu0 0
    %376 = vmatprep.mubr.bf16.mxu0 0
    %377 = vmatmul.mubr.bf16.gmra.mrb[0].mxu0 %v279
    %v378 = vpop.f32.mrb[0].mxu0
    %v379 = vadd.f32 0.0, %v378
    %v380 = vpop.f32.mrb[0].mxu0
    %v381 = vpop.f32.mrb[0].mxu0
    %v382 = vadd.f32 0.0, %v381
    %v383 = vpop.f32.mrb[0].mxu0
    %384 = vdwg.mxu0
    %v385 = vadd.f32 %v277, %v379
    %v386 = vadd.f32 %v278, %v382
    %387 = vst.msk [vmem:[#allocation2] sm:$0xff] %vm159, %v385
    %388 = vst.msk [vmem:[#allocation2 + $0x8] sm:$0xff] %vm159, %v386
    // Predicated region
    $region104: #{tpu_custom_call.1} parent=1 // pred_check
      %p389 = pneg %p129
    $region105: #{tpu_custom_call.1} parent=1 // pred_check_branch
      %391 = sbr.rel (%p389) target = $region107
    $region106: #{tpu_custom_call.1} parent=1 // pred_region
      %v392 = vld [vmem:[#allocation2] sm:$0xff]
      %v393 = vld [vmem:[#allocation2 + $0x8] sm:$0xff]
      %394 = vst.msk [vmem:[#allocation5] sm:$0xff] %vm159, %v392
      %395 = vst.msk [vmem:[#allocation5 + $0x8] sm:$0xff] %vm159, %v393
    $region107: #{tpu_custom_call.1} parent=1 // pred_fallthru
      _
    // Predicated region
    $region108: #{tpu_custom_call.1} parent=1 // pred_check
      _
    $region109: #{tpu_custom_call.1} parent=1 // pred_check_branch
      %397 = sbr.rel (0) target = $region111
    $region110: #{tpu_custom_call.1} parent=1 // pred_region
      %s399 = ssub.s32 256, 256
      %400 = vsyncadd [#allocation6], %s399
      %s401 = sshll.u32 [#allocation5], 4
      %s402 = int_to_ptr.vmem [resolvable:$true] %s401
      %407 = dma.vmem_to_hbm [thread:$0]  %s402, 256, %s4, [#allocation6], 128, 128, 8
    $region111: #{tpu_custom_call.1} parent=1 // pred_fallthru
      _
    // Predicated region
    $region112: #{tpu_custom_call.1} parent=1 // pred_check
      _
    $region113: #{tpu_custom_call.1} parent=1 // pred_check_branch
      %409 = sbr.rel (0) target = $region115
    $region114: #{tpu_custom_call.1} parent=1 // pred_region
      %410 = dma.done [#allocation6], 256
    $region115: #{tpu_custom_call.1} parent=1 // pred_fallthru
      _
    %411 = vsyncpa [#allocation6], 1

</llo_original>
